<compile_context>
chip_gen: v5e
topology: v5e:2x2
jax: 0.10.0
libtpu: 0.0.40
codegen_flags: <defaults>
</compile_context>

<pallas_src>
import jax
import jax.numpy as jnp
from jax.experimental import pallas as pl
from jax.experimental.pallas import tpu as pltpu


def seqloss_kernel(tlen_ref, pred_ref, tgt_ref, out_ref):
    b = pl.program_id(0)   # sequence index (parallel)
    j = pl.program_id(1)   # time-tile index (arbitrary / reduction)

    # init this sequence's accumulator on its first time tile
    @pl.when(j == 0)
    def _():
        out_ref[...] = jnp.zeros_like(out_ref)

    logits = pred_ref[0].astype(jnp.float32)      # (tT, V) — f32 math even for bf16 input
    tgt = tgt_ref[0]                              # (tT, 1) i32
    L = tlen_ref[b]                               # scalar i32: valid positions in this seq

    tT, V = logits.shape

    # numerically-stable logsumexp over the class (lane) axis
    m = jnp.max(logits, axis=-1, keepdims=True)                               # (tT,1)
    lse = jnp.log(jnp.sum(jnp.exp(logits - m), axis=-1, keepdims=True)) + m   # (tT,1)

    # picked logit via masked select (no one-hot multiply, no 0*inf hazard)
    vocab_ids = jax.lax.broadcasted_iota(jnp.int32, (tT, V), 1)               # (tT,V)
    picked = jnp.sum(jnp.where(vocab_ids == tgt, logits, 0.0),
                     axis=-1, keepdims=True)                                  # (tT,1)

    # mask positions beyond this sequence's target length (global time index)
    t_ids = j * tT + jax.lax.broadcasted_iota(jnp.int32, (tT, 1), 0)
    mask = (t_ids < L).astype(jnp.float32)

    out_ref[...] += jnp.sum((lse - picked) * mask)


def _round_up(x, m):
    return ((x + m - 1) // m) * m


def seq_loss(preds, targets_padded, target_lens, *, tile_budget_bytes=8 << 20):
    """preds: [B,T,V] logits (f32 or bf16).
       targets_padded: [B, Tpad] int, each row = full target (incl. leading token).
       target_lens: [B] int, full lengths (incl. leading token)."""
    B, T, V = preds.shape
    itemsize = jnp.dtype(preds.dtype).itemsize

    # pick the largest multiple-of-8 time tile whose (tT, V) logits block fits
    # the per-buffer VMEM budget (v7x-friendly; v5e/v6e could run 2x larger)
    rows_fit = max(8, (tile_budget_bytes // max(V * itemsize, 1)) // 8 * 8)
    tT = int(min(rows_fit, _round_up(T, 8)))
    nT = -(-T // tT)
    T_pad = nT * tT
    # TODO(synk): for very large vocabularies (V tile itself > budget) also tile
    # V and compute the logsumexp online (running max / running sum) in one pass.

    # pad logits along time with zeros (those rows are masked by the length mask)
    preds_p = preds
    if T_pad != T:
        preds_p = jnp.pad(preds, ((0, 0), (0, T_pad - T), (0, 0)))

    # drop leading token of every target (target = target[1:]) and pad/trim to T_pad
    tgt = targets_padded[:, 1:]
    cur = tgt.shape[1]
    if cur < T_pad:
        tgt = jnp.pad(tgt, ((0, 0), (0, T_pad - cur)))
    else:
        tgt = tgt[:, :T_pad]
    tgt = tgt.astype(jnp.int32)[..., None]                       # (B, T_pad, 1)

    # valid positions per sequence; clamp to T so padded rows can never leak in
    tlen = jnp.minimum(target_lens.astype(jnp.int32) - 1, T)     # (B,)

    out = pl.pallas_call(
        seqloss_kernel,
        out_shape=jax.ShapeDtypeStruct((B, 1, 1), jnp.float32),
        grid_spec=pltpu.PrefetchScalarGridSpec(
            num_scalar_prefetch=1,
            grid=(B, nT),
            in_specs=[
                pl.BlockSpec((1, tT, V), lambda b, j, tlen: (b, j, 0)),
                pl.BlockSpec((1, tT, 1), lambda b, j, tlen: (b, j, 0)),
            ],
            out_specs=pl.BlockSpec((1, 1, 1), lambda b, j, tlen: (b, 0, 0)),
        ),
        compiler_params=pltpu.CompilerParams(
            dimension_semantics=("parallel", "arbitrary"),
            vmem_limit_bytes=32 * 1024 * 1024,
        ),
    )(tlen, preds_p, tgt)

    return jnp.sum(out) / jnp.float32(B)


def _ref_loss(preds, targets_padded, target_lens):
    # pure-JAX reference mirroring the PyTorch loop
    B = preds.shape[0]
    total = 0.0
    for b in range(B):
        L = int(target_lens[b]) - 1
        t = targets_padded[b, 1:1 + L]
        logit = preds[b, :L]
        logp = jax.nn.log_softmax(logit, axis=-1)
        total = total + (-jnp.sum(logp[jnp.arange(L), t]))
    return total / B


if __name__ == "__main__":
    key = jax.random.PRNGKey(0)

    # --- test 1: small shapes, bf16 logits (bandwidth-saving path) -----------
    B, T, V = 2, 8, 32
    k1, k2, k3, k4 = jax.random.split(key, 4)

    preds = jax.random.normal(k1, (B, T, V), dtype=jnp.float32).astype(jnp.bfloat16)
    targets_padded = jax.random.randint(k2, (B, T + 1), 0, V, dtype=jnp.int32)
    target_lens = jnp.array([T + 1, 6], dtype=jnp.int32)        # ragged lengths

    loss = seq_loss(preds, targets_padded, target_lens)
    jax.block_until_ready(loss)
    ref = _ref_loss(preds.astype(jnp.float32), targets_padded, target_lens)
    assert jnp.allclose(loss, ref, rtol=1e-5, atol=1e-4), (loss, ref)

    # --- test 2: f32 logits, T not a multiple of the tile, multi-tile grid ---
    B2, T2, V2 = 3, 20, 160
    preds2 = jax.random.normal(k3, (B2, T2, V2), dtype=jnp.float32)
    targets_padded2 = jax.random.randint(k4, (B2, T2 + 1), 0, V2, dtype=jnp.int32)
    target_lens2 = jnp.array([T2 + 1, 10, 5], dtype=jnp.int32)

    # tiny budget forces tT=8, nT=3, T_pad=24 → exercises time-tiling + padding
    loss2 = seq_loss(preds2, targets_padded2, target_lens2, tile_budget_bytes=8 * 1024)
    jax.block_until_ready(loss2)
    ref2 = _ref_loss(preds2, targets_padded2, target_lens2)
    assert jnp.allclose(loss2, ref2, rtol=1e-5, atol=1e-4), (loss2, ref2)

    print("KERNEL_OK")
</pallas_src>

<mosaic_0001>
module attributes {stable_mosaic.version = 11 : i64} {
  func.func @seqloss_kernel(%arg0: i32, %arg1: i32, %arg2: memref<2xi32, #tpu.memory_space<smem>>, %arg3: memref<1x8x32xbf16, #tpu.memory_space<vmem>>, %arg4: memref<1x8x1xi32, #tpu.memory_space<vmem>>, %arg5: memref<1x1x1xf32, #tpu.memory_space<vmem>>) attributes {dimension_semantics = [#tpu.dimension_semantics<parallel>, #tpu.dimension_semantics<arbitrary>], iteration_bounds = array<i64: 2, 1>, scalar_prefetch = 1 : i64, scratch_operands = 0 : i64, tpu.core_type = #tpu.core_type<tc>, window_params = [{transform_indices = @transform_0, window_bounds = array<i64: 1, 8, 32>}, {transform_indices = @transform_1, window_bounds = array<i64: 1, 8, 1>}, {transform_indices = @transform_2, window_bounds = array<i64: 1, 1, 1>}]} {
    %c0_i32 = arith.constant 0 : i32
    %0 = arith.cmpi eq, %arg1, %c0_i32 : i32
    %1 = arith.extui %0 : i1 to i32
    %c0_i32_0 = arith.constant 0 : i32
    %2 = arith.cmpi ne, %1, %c0_i32_0 : i32
    scf.if %2 {
      %cst_16 = arith.constant 0.000000e+00 : f32
      %44 = vector.broadcast %cst_16 : f32 to vector<1x1x1xf32>
      %c0_17 = arith.constant 0 : index
      %c0_18 = arith.constant 0 : index
      %c0_19 = arith.constant 0 : index
      %45 = vector.load %arg5[%c0_17, %c0_18, %c0_19] : memref<1x1x1xf32, #tpu.memory_space<vmem>>, vector<1x1x1xf32>
      tpu.vector_store %arg5[%c0_17, %c0_18, %c0_19], %44 {strides = array<i32>} : memref<1x1x1xf32, #tpu.memory_space<vmem>>, vector<1x1x1xf32>,
    } else {
    }
    %c0 = arith.constant 0 : index
    %c0_1 = arith.constant 0 : index
    %c0_2 = arith.constant 0 : index
    %3 = vector.load %arg3[%c0, %c0_1, %c0_2] : memref<1x8x32xbf16, #tpu.memory_space<vmem>>, vector<1x8x32xbf16>
    %4 = vector.shape_cast %3 : vector<1x8x32xbf16> to vector<8x32xbf16>
    %5 = arith.extf %4 : vector<8x32xbf16> to vector<8x32xf32>
    %c0_3 = arith.constant 0 : index
    %c0_4 = arith.constant 0 : index
    %c0_5 = arith.constant 0 : index
    %6 = vector.load %arg4[%c0_3, %c0_4, %c0_5] : memref<1x8x1xi32, #tpu.memory_space<vmem>>, vector<1x8x1xi32>
    %7 = vector.shape_cast %6 : vector<1x8x1xi32> to vector<8x1xi32>
    %8 = arith.index_cast %arg0 : i32 to index
    %9 = memref.load %arg2[%8] : memref<2xi32, #tpu.memory_space<smem>>
    %cst = arith.constant dense<0xFF800000> : vector<8xf32>
    %10 = vector.multi_reduction <maximumf>, %5, %cst [1] : vector<8x32xf32> to vector<8xf32>
    %11 = vector.shape_cast %10 : vector<8xf32> to vector<8x1xf32>
    %12 = vector.broadcast %11 : vector<8x1xf32> to vector<8x32xf32>
    %13 = arith.subf %5, %12 : vector<8x32xf32>
    %14 = math.exp %13 : vector<8x32xf32>
    %cst_6 = arith.constant dense<0.000000e+00> : vector<8xf32>
    %15 = vector.multi_reduction <add>, %14, %cst_6 [1] : vector<8x32xf32> to vector<8xf32>
    %16 = vector.shape_cast %15 : vector<8xf32> to vector<8x1xf32>
    %17 = math.log %16 : vector<8x1xf32>
    %18 = arith.addf %17, %11 : vector<8x1xf32>
    %19 = tpu.iota {dimensions = array<i32: 1>} : vector<8x32xi32>
    %20 = vector.broadcast %7 : vector<8x1xi32> to vector<8x32xi32>
    %21 = arith.cmpi eq, %19, %20 : vector<8x32xi32>
    %cst_7 = arith.constant 0.000000e+00 : f32
    %22 = vector.broadcast %cst_7 : f32 to vector<8x32xf32>
    %23 = arith.select %21, %5, %22 : vector<8x32xi1>, vector<8x32xf32>
    %cst_8 = arith.constant dense<0.000000e+00> : vector<8xf32>
    %24 = vector.multi_reduction <add>, %23, %cst_8 [1] : vector<8x32xf32> to vector<8xf32>
    %25 = vector.shape_cast %24 : vector<8xf32> to vector<8x1xf32>
    %c8_i32 = arith.constant 8 : i32
    %26 = arith.muli %arg1, %c8_i32 : i32
    %27 = tpu.iota {dimensions = array<i32: 0>} : vector<8x1xi32>
    %28 = vector.broadcast %26 : i32 to vector<8x1xi32>
    %29 = arith.addi %28, %27 : vector<8x1xi32>
    %30 = vector.broadcast %9 : i32 to vector<8x1xi32>
    %31 = arith.cmpi slt, %29, %30 : vector<8x1xi32>
    %32 = arith.extui %31 : vector<8x1xi1> to vector<8x1xi32>
    %33 = arith.sitofp %32 : vector<8x1xi32> to vector<8x1xf32>
    %c0_9 = arith.constant 0 : index
    %c0_10 = arith.constant 0 : index
    %c0_11 = arith.constant 0 : index
    %34 = vector.load %arg5[%c0_9, %c0_10, %c0_11] : memref<1x1x1xf32, #tpu.memory_space<vmem>>, vector<1x1x1xf32>
    %35 = arith.subf %18, %25 : vector<8x1xf32>
    %36 = arith.mulf %35, %33 : vector<8x1xf32>
    %37 = vector.shape_cast %36 : vector<8x1xf32> to vector<1x8x1xf32>
    %cst_12 = arith.constant dense<0.000000e+00> : vector<1xf32>
    %38 = vector.multi_reduction <add>, %37, %cst_12 [1, 2] : vector<1x8x1xf32> to vector<1xf32>
    %39 = vector.shape_cast %38 : vector<1xf32> to vector<1x1x1xf32>
    %40 = vector.extract %39[0, 0, 0] : f32 from vector<1x1x1xf32>
    %41 = vector.broadcast %40 : f32 to vector<1x1x1xf32>
    %42 = arith.addf %34, %41 : vector<1x1x1xf32>
    %c0_13 = arith.constant 0 : index
    %c0_14 = arith.constant 0 : index
    %c0_15 = arith.constant 0 : index
    %43 = vector.load %arg5[%c0_13, %c0_14, %c0_15] : memref<1x1x1xf32, #tpu.memory_space<vmem>>, vector<1x1x1xf32>
    tpu.vector_store %arg5[%c0_13, %c0_14, %c0_15], %42 {strides = array<i32>} : memref<1x1x1xf32, #tpu.memory_space<vmem>>, vector<1x1x1xf32>,
    return
  }
  func.func @transform_0(%arg0: i32, %arg1: i32, %arg2: memref<2xi32, #tpu.memory_space<smem>>) -> (i32, i32, i32) {
    %c0_i32 = arith.constant 0 : i32
    %c0_i32_0 = arith.constant 0 : i32
    return %arg0, %arg1, %c0_i32 : i32, i32, i32
  }
  func.func @transform_1(%arg0: i32, %arg1: i32, %arg2: memref<2xi32, #tpu.memory_space<smem>>) -> (i32, i32, i32) {
    %c0_i32 = arith.constant 0 : i32
    %c0_i32_0 = arith.constant 0 : i32
    return %arg0, %arg1, %c0_i32 : i32, i32, i32
  }
  func.func @transform_2(%arg0: i32, %arg1: i32, %arg2: memref<2xi32, #tpu.memory_space<smem>>) -> (i32, i32, i32) {
    %c0_i32 = arith.constant 0 : i32
    %c0_i32_0 = arith.constant 0 : i32
    %c0_i32_1 = arith.constant 0 : i32
    return %arg0, %c0_i32, %c0_i32_0 : i32, i32, i32
  }
}

</mosaic_0001>

<llo_original>
// kernel: tpu_custom_call.1
$region0: #{tpu_custom_call.1}
  #allocation0 [shape = 'u32[]', space=smem, size = 0x4, offset = 0x4, fixed_abs, tag = 'smem constant byte address 0x4 - core index']
  #allocation1 [shape = 'u32[72,128]{1,0:T(1,128)}', space=vmem, size = 0x9000, scoped, tag = 'internal scratch']
  #allocation2 [shape = 's32[1]{0}', space=sflag, size = 0x4, scoped, tag = 'scoped memory for tpu_custom_call.1']
  #allocation3 [shape = 'u8[512]{0}', space=smem, size = 0x200, scoped, tag = 'prefetched SMEM operand 0']
  %s0 = inlined_call_operand.vmem [shape: s32[2], index: 0, kind: input, shape index: {}]
  %s1 = inlined_call_operand.vmem [shape: bf16[2,8,32], index: 1, kind: input, shape index: {}]
  %s2 = inlined_call_operand.vmem [shape: s32[2,8,1], index: 2, kind: input, shape index: {}]
  %s3 = inlined_call_operand.vmem [shape: f32[2,1,1], index: 3, kind: output, shape index: {}]
  %s4 = sld [smem:[#allocation0]]
  $region45: #{tpu_custom_call.1} parent=0
    _
  %s6 = ssub.s32 1, %s4
  %s7 = scalar_select 0, %s6, %s4
  %s9 = sshll.u32 %s0, 4
  %s10 = int_to_ptr.vmem [resolvable:$true] %s9
  %12 = dma.vmem_to_smem %s10, 16, [#allocation3], [#allocation2]
  %14 = dma.done [#allocation2], 16
  %15 = sfence
  loop: start=0, step=1, limit=4
  $region2: #{tpu_custom_call.1} parent=0 // loop_pre_header
    _
  $region3: #{tpu_custom_call.1} parent=0 // loop_header
    %s17 = sphi 0, %s21
    %p18 = scmp.ge.s32.totalorder %s17, 4
    %s24 = sphi 0, %s36
    %s25 = sphi 0, %s32
    %s26 = sphi 0, %s24
    %s27 = sphi 0, %s25
    %s28 = sphi 0, %s26
    %s29 = sphi 0, %s27
    %s41 = sphi 0, %s43
    %s44 = sphi 0, %s41
    %s45 = sphi 0, %s44
    %s61 = sphi 0, %s45
    %s69 = sphi 0, %s71
    %s72 = sphi 0, %s69
    %s73 = sphi 0, %s72
    %s89 = sphi 0, %s73
    %s95 = sphi 0, %s97
    %s98 = sphi 0, %s95
    %s99 = sphi 0, %s98
    %s115 = sphi 0, %s99
  $region4: #{tpu_custom_call.1} parent=0 // loop_header_branch
    %20 = sbr.rel (%p18) target = $region8
  $region5: #{tpu_custom_call.1} parent=0 // loop_body
    %s22 = ssub.s32 %s17, 1
    %s23 = ssub.s32 %s17, 2
    %s30 = sadd.s32 1, %s25
    %p31 = scmp.ge.s32.totalorder %s30, 1
    %s32 = scalar_select %p31, 0, %s30
    %s33 = sadd.s32 1, %s24
    %s34 = scalar_select %p31, %s33, %s24
    %p35 = scmp.ge.s32.totalorder %s34, 2
    %s36 = scalar_select %p35, 0, %s34
    %s37 = ssub.s32 %s24, %s36
    %s38 = ssub.s32 %s25, %s32
    %s39 = sor.u32 %s37, %s38
    %p40 = scmp.eq.s32.totalorder %s39, 0
    %s42 = sadd.s32 %s41, 1
    %s43 = scalar_select %p40, %s41, %s42
    %p46 = pneg %p40
    %p47 = scmp.eq.s32.totalorder %s17, 1
    %p48 = por %p46, %p47
    %p49 = scmp.ne.s32.totalorder %s41, %s44
    %p50 = scmp.eq.s32.totalorder %s17, 0
    %p51 = por %p49, %p50
    %p52 = scmp.ne.s32.totalorder %s41, %s44
    %p53 = scmp.eq.s32.totalorder %s22, 1
    %p54 = por %p52, %p53
    %p55 = scmp.ne.s32.totalorder %s44, %s45
    %p56 = scmp.eq.s32.totalorder %s22, 0
    %p57 = por %p55, %p56
    %p58 = scmp.ne.s32.totalorder %s44, %s45
    %p59 = scmp.eq.s32.totalorder %s23, 1
    %p60 = por %p58, %p59
    %p62 = scmp.ne.s32.totalorder %s45, %s61
    %p63 = scmp.eq.s32.totalorder %s23, 0
    %p64 = por %p62, %p63
    %s65 = ssub.s32 %s24, %s36
    %s66 = ssub.s32 %s25, %s32
    %s67 = sor.u32 %s65, %s66
    %p68 = scmp.eq.s32.totalorder %s67, 0
    %s70 = sadd.s32 %s69, 1
    %s71 = scalar_select %p68, %s69, %s70
    %p74 = pneg %p68
    %p75 = scmp.eq.s32.totalorder %s17, 1
    %p76 = por %p74, %p75
    %p77 = scmp.ne.s32.totalorder %s69, %s72
    %p78 = scmp.eq.s32.totalorder %s17, 0
    %p79 = por %p77, %p78
    %p80 = scmp.ne.s32.totalorder %s69, %s72
    %p81 = scmp.eq.s32.totalorder %s22, 1
    %p82 = por %p80, %p81
    %p83 = scmp.ne.s32.totalorder %s72, %s73
    %p84 = scmp.eq.s32.totalorder %s22, 0
    %p85 = por %p83, %p84
    %p86 = scmp.ne.s32.totalorder %s72, %s73
    %p87 = scmp.eq.s32.totalorder %s23, 1
    %p88 = por %p86, %p87
    %p90 = scmp.ne.s32.totalorder %s73, %s89
    %p91 = scmp.eq.s32.totalorder %s23, 0
    %p92 = por %p90, %p91
    %s93 = ssub.s32 %s24, %s36
    %p94 = scmp.eq.s32.totalorder %s93, 0
    %s96 = sadd.s32 %s95, 1
    %s97 = scalar_select %p94, %s95, %s96
    %p100 = pneg %p94
    %p101 = scmp.eq.s32.totalorder %s17, 1
    %p102 = por %p100, %p101
    %p103 = scmp.ne.s32.totalorder %s95, %s98
    %p104 = scmp.eq.s32.totalorder %s17, 0
    %p105 = por %p103, %p104
    %p106 = scmp.ne.s32.totalorder %s95, %s98
    %p107 = scmp.eq.s32.totalorder %s22, 1
    %p108 = por %p106, %p107
    %p109 = scmp.ne.s32.totalorder %s98, %s99
    %p110 = scmp.eq.s32.totalorder %s22, 0
    %p111 = por %p109, %p110
    %p112 = scmp.ne.s32.totalorder %s98, %s99
    %p113 = scmp.eq.s32.totalorder %s23, 1
    %p114 = por %p112, %p113
    %p116 = scmp.ne.s32.totalorder %s99, %s115
    %p117 = scmp.eq.s32.totalorder %s23, 0
    %p118 = por %p116, %p117
    %p119 = scmp.le.s32.totalorder 1, %s17
    %p120 = scmp.lt.s32.totalorder %s17, 3
    %p121 = pnand %p119, %p120
    %p122 = pneg %p121
    // Predicated region
    $region9: #{tpu_custom_call.1} parent=5 // pred_check
      _
    $region10: #{tpu_custom_call.1} parent=5 // pred_check_branch
      %124 = sbr.rel (%p121) target = $region12
    $region11: #{tpu_custom_call.1} parent=5 // pred_region
      %s125 = ssub.s32 %s17, 1
    $region12: #{tpu_custom_call.1} parent=5 // pred_fallthru
      _
    %p126 = scmp.lt.s32.totalorder %s17, 2
    // Predicated region
    $region13: #{tpu_custom_call.1} parent=5 // pred_check
      %p127 = pneg %p126
    $region14: #{tpu_custom_call.1} parent=5 // pred_check_branch
      %129 = sbr.rel (%p127) target = $region16
    $region15: #{tpu_custom_call.1} parent=5 // pred_region
      // Predicated region
      $region17: #{tpu_custom_call.1} parent=15 // pred_check
        %p130 = pneg %p51
      $region18: #{tpu_custom_call.1} parent=15 // pred_check_branch
        %132 = sbr.rel (%p130) target = $region20
      $region19: #{tpu_custom_call.1} parent=15 // pred_region
        %p133 = scmp.lt.s32.totalorder %s24, 1
        %s134 = scalar_select %p133, %s24, 1
        %p135 = scmp.lt.s32.totalorder %s25, 0
        %s136 = scalar_select %p135, %s25, 0
        %s137 = sadd.s32 %s136, %s134
        %s138 = smul.addr %s137, 4
        %s139 = scalar_lea.vmem %s1, %s138
      $region20: #{tpu_custom_call.1} parent=15 // pred_fallthru
        _
      // Predicated region
      $region21: #{tpu_custom_call.1} parent=15 // pred_check
        %p140 = pneg %p79
      $region22: #{tpu_custom_call.1} parent=15 // pred_check_branch
        %142 = sbr.rel (%p140) target = $region24
      $region23: #{tpu_custom_call.1} parent=15 // pred_region
        %p143 = scmp.lt.s32.totalorder %s24, 1
        %s144 = scalar_select %p143, %s24, 1
        %p145 = scmp.lt.s32.totalorder %s25, 0
        %s146 = scalar_select %p145, %s25, 0
        %s147 = sadd.s32 %s146, %s144
        %s148 = smul.addr %s147, 8
        %s149 = scalar_lea.vmem %s2, %s148
      $region24: #{tpu_custom_call.1} parent=15 // pred_fallthru
        _
    $region16: #{tpu_custom_call.1} parent=5 // pred_fallthru
      _
    %p150 = scmp.le.s32.totalorder 1, %s17
    %p151 = scmp.lt.s32.totalorder %s17, 3
    %p152 = pnand %p150, %p151
    %p153 = pneg %p152
    // Predicated region
    $region25: #{tpu_custom_call.1} parent=5 // pred_check
      _
    $region26: #{tpu_custom_call.1} parent=5 // pred_check_branch
      %155 = sbr.rel (%p152) target = $region28
    $region27: #{tpu_custom_call.1} parent=5 // pred_region
      %s156 = ssub.s32 %s17, 1
      %p157 = scmp.lt.s32.totalorder %s26, 1
      %s158 = scalar_select %p157, %s26, 1
      %p159 = scmp.lt.s32.totalorder %s27, 0
      %s160 = scalar_select %p159, %s27, 0
      %s161 = sadd.s32 %s160, %s158
      %s162 = smul.addr %s161, 4
      %s163 = scalar_lea.vmem %s1, %s162
      %p164 = pneg %p57
      %p165 = pneg %p54
      %p166 = scmp.lt.s32.totalorder %s26, 1
      %s167 = scalar_select %p166, %s26, 1
      %p168 = scmp.lt.s32.totalorder %s27, 0
      %s169 = scalar_select %p168, %s27, 0
      %s170 = sadd.s32 %s169, %s167
      %s171 = smul.addr %s170, 8
      %s172 = scalar_lea.vmem %s2, %s171
      %p173 = pneg %p85
      %p174 = pneg %p82
      %p175 = pneg %p111
      %p176 = pneg %p108
      %p177 = scmp.lt.s32.totalorder %s26, 1
      %s178 = scalar_select %p177, %s26, 1
      %s179 = scalar_lea.vmem %s3, %s178
      %p180 = scmp.lt.s32.totalorder %s26, 1
      %s181 = scalar_select %p180, %s26, 1
      %p182 = scmp.lt.s32.totalorder %s27, 0
      %s183 = scalar_select %p182, %s27, 0
      %s184 = sadd.s32 %s183, %s181
      %s185 = smul.addr %s184, 4
      %s186 = scalar_lea.vmem %s1, %s185
      %p187 = scmp.lt.s32.totalorder %s26, 1
      %s188 = scalar_select %p187, %s26, 1
      %p189 = scmp.lt.s32.totalorder %s27, 0
      %s190 = scalar_select %p189, %s27, 0
      %s191 = sadd.s32 %s190, %s188
      %s192 = smul.addr %s191, 8
      %s193 = scalar_lea.vmem %s2, %s192
      %p194 = scmp.lt.s32.totalorder %s26, 1
      %s195 = scalar_select %p194, %s26, 1
      %s196 = scalar_lea.vmem %s3, %s195
      %p197 = scmp.eq.s32.totalorder %s27, 0
      // Predicated region
      $region29: #{tpu_custom_call.1} parent=27 // pred_check
        %p198 = pneg %p197
      $region30: #{tpu_custom_call.1} parent=27 // pred_check_branch
        %200 = sbr.rel (%p198) target = $region32
      $region31: #{tpu_custom_call.1} parent=27 // pred_region
        %vm201 = vcmask 0
        %202 = vst.msk [vmem:[%s196] sm:$0x1] %vm201, 0.0
      $region32: #{tpu_custom_call.1} parent=27 // pred_fallthru
        _
      %v203 = vld [vmem:[%s186] sm:$0xf]
      %v204 = vunpack.c.l.bf16 %v203
      %v205 = vld [vmem:[%s193] sm:$0xff]
      %s206 = sld [smem:[#allocation3 + %s26]]
      %vm207 = vcmask 261120
      %v208 = vsel %vm207, %v204, -inf
      %209 = vmax.xlane.f32.xlu0 %v208
      %v210 = vpop.xlane.xlu0 %209
      %v211 = vsub.f32 %v204, %v210
      %v212 = vmul.f32 %v211, 1.442695
      %v213 = vpow.pop %v212
      %v214 = vsel %vm207, %v213, 0.0
      %215 = vadd.xlane.f32.xlu0 %v214
      %v216 = vpop.xlane.xlu0 %215
      %v217 = vlog2.pop %v216
      %v218 = vmul.f32 %v217, 0.6931472
      %v219 = vadd.f32 %v218, %v210
      %v220 = vlaneseq
      %v221 = vand.u32 %v220, 127
      %222 = vset.pattern.permute.xlu0 0
      %223 = vperm.xlu0 %222, %v205
      %v224 = vpop.permute.xlu0 %223
      %vm225 = vcmp.eq.s32.totalorder %v221, %v224
      %v226 = vsel %vm225, %v204, 0.0
      %v227 = vsel %vm207, %v226, 0.0
      %228 = vadd.xlane.f32.xlu0 %v227
      %v229 = vpop.xlane.xlu0 %228
      %s230 = smul.u32 %s27, 8
      %v231 = vlaneseq
      %v232 = vshrl.u32 %v231, 7
      %v233 = vstv %s230
      %v234 = vadd.s32 %v233, %v232
      %v235 = vstv %s206
      %vm236 = vcmp.lt.s32.totalorder %v234, %v235
      %v237 = vsel %vm236, 1, 0
      %v238 = vcvt.s32.f32 %v237
      %v239 = vld [vmem:[%s196] sm:$0x1]
      %v240 = vsub.f32 %v219, %v229
      %v241 = vmul.f32 %v240, %v238
      %vm242 = vcmask 7168
      %v243 = vsel %vm242, %v241, 0.0
      %244 = vadd.xlane.f32.xlu0 %v243
      %v245 = vpop.xlane.xlu0 %244
      %v246 = vrot.slane %v245, 4
      %v247 = vadd.f32 %v245, %v246
      %v248 = vrot.slane %v247, 2
      %v249 = vadd.f32 %v247, %v248
      %v250 = vrot.slane %v249, 1
      %v251 = vadd.f32 %v249, %v250
      %s252 = vtos %v251
      %v253 = vstv %s252
      %v254 = vadd.f32 %v239, %v253
      %vm255 = vcmask 0
      %256 = vst.msk [vmem:[%s196] sm:$0x1] %vm255, %v254
      %p257 = scmp.lt.s32.totalorder %s26, 1
      %s258 = scalar_select %p257, %s26, 1
      %s259 = scalar_lea.vmem %s3, %s258
      // Predicated region
      $region33: #{tpu_custom_call.1} parent=27 // pred_check
        %p260 = pneg %p108
      $region34: #{tpu_custom_call.1} parent=27 // pred_check_branch
        %262 = sbr.rel (%p260) target = $region36
      $region35: #{tpu_custom_call.1} parent=27 // pred_region
        _
      $region36: #{tpu_custom_call.1} parent=27 // pred_fallthru
        _
    $region28: #{tpu_custom_call.1} parent=5 // pred_fallthru
      _
    %p263 = scmp.le.s32.totalorder 2, %s17
    // Predicated region
    $region37: #{tpu_custom_call.1} parent=5 // pred_check
      %p264 = pneg %p263
    $region38: #{tpu_custom_call.1} parent=5 // pred_check_branch
      %266 = sbr.rel (%p264) target = $region40
    $region39: #{tpu_custom_call.1} parent=5 // pred_region
      %s267 = ssub.s32 %s17, 2
      // Predicated region
      $region41: #{tpu_custom_call.1} parent=39 // pred_check
        %p268 = pneg %p114
      $region42: #{tpu_custom_call.1} parent=39 // pred_check_branch
        %270 = sbr.rel (%p268) target = $region44
      $region43: #{tpu_custom_call.1} parent=39 // pred_region
        %p271 = scmp.lt.s32.totalorder %s28, 1
        %s272 = scalar_select %p271, %s28, 1
        %s273 = scalar_lea.vmem %s3, %s272
      $region44: #{tpu_custom_call.1} parent=39 // pred_fallthru
        _
    $region40: #{tpu_custom_call.1} parent=5 // pred_fallthru
      _
  $region6: #{tpu_custom_call.1} parent=0 // loop_footer
    %s21 = sadd.s32 1, %s17
  $region7: #{tpu_custom_call.1} parent=0 // loop_footer_branch
    %16 = sbr.rel target = $region3
  $region8: #{tpu_custom_call.1} parent=0 // loop_exit
    _

</llo_original>
